<compile_context>
chip_gen: v7x
topology: tpu7x:2x2x1
jax: 0.10.0
libtpu: 0.0.40
codegen_flags: <defaults>
</compile_context>

<pallas_src>
import functools

import jax
import jax.numpy as jnp
from jax import lax
from jax.experimental import pallas as pl
from jax.experimental.pallas import tpu as pltpu


# ----------------------------------------------------------------------------
# Stage 1: pipelined max-reduction over the proposal axis P
# (optionally also extracts the matched rows simMM[i, :, i] for the entropy term).
# ----------------------------------------------------------------------------
def _make_simmax_kernel(TB, TP, extract_match):
    def kernel(sim_ref, smax_ref, *maybe_match_ref):
        k = pl.program_id(1)                       # reduction step over P tiles
        tile = sim_ref[...].astype(jnp.float32)    # (TB, B, TP) lane-dense in P
        tile_max = jnp.max(tile, axis=-1)          # (TB, B)

        @pl.when(k == 0)
        def _init():
            smax_ref[...] = tile_max

        @pl.when(k > 0)
        def _update():
            smax_ref[...] = jnp.maximum(smax_ref[...], tile_max)

        if extract_match:
            # Matched pairs simMM[i, :, i]: pick the diagonal of the TBxTB
            # sub-block of the current row block.  Data is already in VMEM, so
            # this costs O(TB*TB*TP) per tile instead of a second full pass
            # over B*B*P with a broadcast mask.
            match_ref = maybe_match_ref[0]
            base = pl.multiple_of(pl.program_id(0) * TB, TB)
            sub = sim_ref[:, pl.ds(base, TB), :].astype(jnp.float32)  # (TB, TB, TP)
            r = lax.broadcasted_iota(jnp.int32, (TB, TB), 0)
            c = lax.broadcasted_iota(jnp.int32, (TB, TB), 1)
            sel = (r == c).astype(jnp.float32)                        # (TB, TB)
            match_ref[...] = jnp.sum(sub * sel[:, :, None], axis=1)   # (TB, TP)

    return kernel


# ----------------------------------------------------------------------------
# Stage 2: small finalize kernel -> scalar loss.
# ----------------------------------------------------------------------------
def _make_finalize_kernel(margin, entropy_regu_flag, lamda2):
    def kernel(smax_ref, lblc_ref, lblr_ref, *rest):
        if entropy_regu_flag:
            match_ref, out_ref = rest
        else:
            (out_ref,) = rest

        sm = smax_ref[...]                         # (B, B) f32
        B = sm.shape[0]
        row_i = lax.broadcasted_iota(jnp.int32, (B, B), 0)
        col_j = lax.broadcasted_iota(jnp.int32, (B, B), 1)
        eye = (row_i == col_j).astype(jnp.float32)

        # pos_diag broadcast as a row (pd[j]) and as a column (pd[i]).
        pd_row = jnp.sum(sm * eye, axis=0, keepdims=True)   # (1, B)
        pd_col = jnp.sum(sm * eye, axis=1, keepdims=True)   # (B, 1)

        # mask_val[i, j] = 0 if lbl[i] == lbl[j] else 1 (diagonal always 0)
        mask = (lblc_ref[...] != lblr_ref[...]).astype(jnp.float32)   # (B, B)

        # Hinge terms via maximum; both terms share one masked reduction.
        hinge = (jnp.maximum(sm - pd_row + margin, 0.0)
                 + jnp.maximum(sm - pd_col + margin, 0.0))
        pair_num = 1e-6 + jnp.sum(mask)
        loss = jnp.sum(hinge * mask) / pair_num

        if entropy_regu_flag:
            # HLoss on matched rows (B, P): mean over batch of -sum(p * log p, dim=1)
            x = match_ref[...]
            m = jnp.max(x, axis=1, keepdims=True)
            z = x - m
            s = jnp.sum(jnp.exp(z), axis=1, keepdims=True)
            logp = z - jnp.log(s)
            p = jnp.exp(logp)
            ent = -jnp.sum(p * logp, axis=1, keepdims=True)           # (B, 1)
            loss = loss + lamda2 * (jnp.sum(ent) / jnp.float32(B))

        out_ref[0, 0] = loss

    return kernel


# ----------------------------------------------------------------------------
# Tile selection.
# ----------------------------------------------------------------------------
def _pick_p_tile(P):
    for c in (512, 256, 128):
        if P % c == 0:
            return c
    return P  # small / irregular P: take the whole axis in one block


def _pick_row_tile(B, b_cols, TP, itemsize, budget=4 * 1024 * 1024):
    # Keep (block bytes x 2 double-buffers) well under scoped VMEM on all gens
    # (v5e 16 MiB default, v7x 64 MiB physical).  Prefer >= 2 row blocks so the
    # "parallel" row axis can be split across v7x's two TensorCores.
    if B % 8 != 0:
        return B
    cap = B if B == 8 else B // 2
    best = 8
    t = 8
    while t <= cap:
        if B % t == 0 and t * b_cols * TP * itemsize <= budget:
            best = t
        t *= 2
    return best


# ----------------------------------------------------------------------------
# Public wrapper.
# ----------------------------------------------------------------------------
@functools.partial(jax.jit, static_argnames=("margin", "entropy_regu_flag", "lamda2"))
def coatt_loss(simMM, labels, margin=0.1, entropy_regu_flag=False, lamda2=0.1):
    """Pallas equivalent of lossEvaluator.forwardCoAtt_efficient.

    simMM:  (B, P, B, 1) similarity volume (f32 or bf16; bf16 halves HBM traffic).
    labels: (B,) int32 class labels (the lblList).
    Returns a scalar float32 loss.
    """
    B, P, B2, _ = simMM.shape
    assert B == B2

    sim = simMM.reshape(B, P, B)                  # squeeze(3)
    if sim.dtype not in (jnp.float32, jnp.bfloat16):
        sim = sim.astype(jnp.float32)
    # Lane-dense layout: put the reduction axis P on the 128-lane axis.
    sim_t = jnp.transpose(sim, (0, 2, 1))          # (B_rows, B_cols, P)

    TP = _pick_p_tile(P)
    TB = _pick_row_tile(B, B, TP, sim_t.dtype.itemsize)
    grid = (B // TB, P // TP)

    kernel_a = _make_simmax_kernel(TB, TP, bool(entropy_regu_flag))

    if entropy_regu_flag:
        out_shape = (jax.ShapeDtypeStruct((B, B), jnp.float32),
                     jax.ShapeDtypeStruct((B, P), jnp.float32))
        out_specs = (pl.BlockSpec((TB, B), lambda i, k: (i, 0)),
                     pl.BlockSpec((TB, TP), lambda i, k: (i, k)))
    else:
        out_shape = jax.ShapeDtypeStruct((B, B), jnp.float32)
        out_specs = pl.BlockSpec((TB, B), lambda i, k: (i, 0))

    stage1 = pl.pallas_call(
        kernel_a,
        out_shape=out_shape,
        grid_spec=pltpu.PrefetchScalarGridSpec(
            num_scalar_prefetch=0,
            grid=grid,
            in_specs=[pl.BlockSpec((TB, B, TP), lambda i, k: (i, 0, k))],
            out_specs=out_specs,
        ),
        compiler_params=pltpu.CompilerParams(
            dimension_semantics=("parallel", "arbitrary"),
            vmem_limit_bytes=32 * 1024 * 1024,
        ),
    )(sim_t)

    if entropy_regu_flag:
        sim_max, matched = stage1
    else:
        sim_max = stage1
        matched = None

    lbl = labels.astype(jnp.int32)
    lbl_col = lbl.reshape(B, 1)
    lbl_row = lbl.reshape(1, B)

    kernel_b = _make_finalize_kernel(float(margin), bool(entropy_regu_flag),
                                     float(lamda2))

    vmem = pltpu.MemorySpace.VMEM
    in_ops = [sim_max, lbl_col, lbl_row]
    in_specs = [pl.BlockSpec(memory_space=vmem),
                pl.BlockSpec(memory_space=vmem),
                pl.BlockSpec(memory_space=vmem)]
    if entropy_regu_flag:
        in_ops.append(matched)
        in_specs.append(pl.BlockSpec(memory_space=vmem))

    out = pl.pallas_call(
        kernel_b,
        out_shape=jax.ShapeDtypeStruct((1, 1), jnp.float32),
        in_specs=in_specs,
        out_specs=pl.BlockSpec(memory_space=pltpu.MemorySpace.SMEM),
    )(*in_ops)
    return out[0, 0]


# ----------------------------------------------------------------------------
# Pure-JAX reference mirroring the PyTorch code (for verification).
# ----------------------------------------------------------------------------
def coatt_loss_ref(simMM, labels, margin=0.1, entropy_regu_flag=False, lamda2=0.1):
    B, P, _, _ = simMM.shape
    sim = simMM.reshape(B, P, B).astype(jnp.float32)
    sim_max = jnp.max(sim, axis=1)                            # (B, B)
    pos_diag = jnp.diagonal(sim_max)                          # (B,)
    pd_row = pos_diag[None, :]
    pd_col = pos_diag[:, None]
    mask = (labels[:, None] != labels[None, :]).astype(jnp.float32)
    pair_num = 1e-6 + jnp.sum(mask)
    lm1 = sim_max - pd_row + margin
    lm2 = sim_max - pd_col + margin
    loss1 = jnp.sum(lm1 * (lm1 > 0) * mask)
    loss2 = jnp.sum(lm2 * (lm2 > 0) * mask)
    loss = (loss1 + loss2) / pair_num
    if entropy_regu_flag:
        match = sim[jnp.arange(B), :, jnp.arange(B)]          # (B, P)
        logp = jax.nn.log_softmax(match, axis=1)
        p = jax.nn.softmax(match, axis=1)
        entro = jnp.mean(-jnp.sum(p * logp, axis=1))
        loss = loss + lamda2 * entro
    return loss


if __name__ == "__main__":
    key = jax.random.PRNGKey(0)
    k_sim, k_lbl, k2_sim, k2_lbl = jax.random.split(key, 4)

    # Small case (module-sized test): B=8, P=16 proposals.
    B, P = 8, 16
    simMM = jax.random.normal(k_sim, (B, P, B, 1), dtype=jnp.float32)
    labels = jax.random.randint(k_lbl, (B,), 0, 4, dtype=jnp.int32)

    loss = coatt_loss(simMM, labels, margin=0.1, entropy_regu_flag=False)
    jax.block_until_ready(loss)
    ref = coatt_loss_ref(simMM, labels, margin=0.1, entropy_regu_flag=False)
    assert jnp.allclose(loss, ref, atol=1e-5, rtol=1e-5), (loss, ref)

    loss_e = coatt_loss(simMM, labels, margin=0.1, entropy_regu_flag=True, lamda2=0.1)
    jax.block_until_ready(loss_e)
    ref_e = coatt_loss_ref(simMM, labels, margin=0.1, entropy_regu_flag=True, lamda2=0.1)
    assert jnp.allclose(loss_e, ref_e, atol=1e-5, rtol=1e-5), (loss_e, ref_e)

    # Larger case exercising the tiled / pipelined reduction path
    # (multiple P-steps on the "arbitrary" reduction axis, row blocks on the
    #  "parallel" axis) plus the in-kernel matched-row extraction.
    B2_, P2_ = 16, 384
    simMM2 = jax.random.normal(k2_sim, (B2_, P2_, B2_, 1), dtype=jnp.float32)
    labels2 = jax.random.randint(k2_lbl, (B2_,), 0, 5, dtype=jnp.int32)
    loss2 = coatt_loss(simMM2, labels2, margin=0.1, entropy_regu_flag=True, lamda2=0.1)
    jax.block_until_ready(loss2)
    ref2 = coatt_loss_ref(simMM2, labels2, margin=0.1, entropy_regu_flag=True, lamda2=0.1)
    assert jnp.allclose(loss2, ref2, atol=1e-5, rtol=1e-5), (loss2, ref2)

    print("KERNEL_OK")
</pallas_src>

<mosaic_0001>
module attributes {stable_mosaic.version = 11 : i64} {
  func.func @kernel(%arg0: i32, %arg1: i32, %arg2: memref<8x8x16xf32, #tpu.memory_space<vmem>>, %arg3: memref<8x8xf32, #tpu.memory_space<vmem>>) attributes {dimension_semantics = [#tpu.dimension_semantics<parallel>, #tpu.dimension_semantics<arbitrary>], iteration_bounds = array<i64: 1, 1>, scalar_prefetch = 0 : i64, scratch_operands = 0 : i64, tpu.core_type = #tpu.core_type<tc>, window_params = [{transform_indices = @transform_0, window_bounds = array<i64: 8, 8, 16>}, {transform_indices = @transform_1, window_bounds = array<i64: 8, 8>}]} {
    %c0 = arith.constant 0 : index
    %c0_0 = arith.constant 0 : index
    %c0_1 = arith.constant 0 : index
    %0 = vector.load %arg2[%c0, %c0_0, %c0_1] : memref<8x8x16xf32, #tpu.memory_space<vmem>>, vector<8x8x16xf32>
    %cst = arith.constant dense<0xFF800000> : vector<8x8xf32>
    %1 = vector.multi_reduction <maximumf>, %0, %cst [2] : vector<8x8x16xf32> to vector<8x8xf32>
    %c0_i32 = arith.constant 0 : i32
    %2 = arith.cmpi eq, %arg1, %c0_i32 : i32
    %3 = arith.extui %2 : i1 to i32
    %c0_i32_2 = arith.constant 0 : i32
    %4 = arith.cmpi ne, %3, %c0_i32_2 : i32
    scf.if %4 {
      %c0_5 = arith.constant 0 : index
      %c0_6 = arith.constant 0 : index
      %8 = vector.load %arg3[%c0_5, %c0_6] : memref<8x8xf32, #tpu.memory_space<vmem>>, vector<8x8xf32>
      tpu.vector_store %arg3[%c0_5, %c0_6], %1 {strides = array<i32>} : memref<8x8xf32, #tpu.memory_space<vmem>>, vector<8x8xf32>,
    } else {
    }
    %c0_i32_3 = arith.constant 0 : i32
    %5 = arith.cmpi sgt, %arg1, %c0_i32_3 : i32
    %6 = arith.extui %5 : i1 to i32
    %c0_i32_4 = arith.constant 0 : i32
    %7 = arith.cmpi ne, %6, %c0_i32_4 : i32
    scf.if %7 {
      %c0_5 = arith.constant 0 : index
      %c0_6 = arith.constant 0 : index
      %8 = vector.load %arg3[%c0_5, %c0_6] : memref<8x8xf32, #tpu.memory_space<vmem>>, vector<8x8xf32>
      %9 = arith.maximumf %8, %1 : vector<8x8xf32>
      %c0_7 = arith.constant 0 : index
      %c0_8 = arith.constant 0 : index
      %10 = vector.load %arg3[%c0_7, %c0_8] : memref<8x8xf32, #tpu.memory_space<vmem>>, vector<8x8xf32>
      tpu.vector_store %arg3[%c0_7, %c0_8], %9 {strides = array<i32>} : memref<8x8xf32, #tpu.memory_space<vmem>>, vector<8x8xf32>,
    } else {
    }
    return
  }
  func.func @transform_0(%arg0: i32, %arg1: i32) -> (i32, i32, i32) {
    %c0_i32 = arith.constant 0 : i32
    %c0_i32_0 = arith.constant 0 : i32
    return %arg0, %c0_i32, %arg1 : i32, i32, i32
  }
  func.func @transform_1(%arg0: i32, %arg1: i32) -> (i32, i32) {
    %c0_i32 = arith.constant 0 : i32
    %c0_i32_0 = arith.constant 0 : i32
    return %arg0, %c0_i32 : i32, i32
  }
}

module attributes {stable_mosaic.version = 11 : i64} {
  func.func @kernel(%arg0: memref<8x8xf32, #tpu.memory_space<vmem>>, %arg1: memref<8x1xi32, #tpu.memory_space<vmem>>, %arg2: memref<1x8xi32, #tpu.memory_space<vmem>>, %arg3: memref<1x1xf32, #tpu.memory_space<smem>>) attributes {dimension_semantics = [], scalar_prefetch = 0 : i64, scratch_operands = 0 : i64, tpu.core_type = #tpu.core_type<tc>} {
    %c0 = arith.constant 0 : index
    %c0_0 = arith.constant 0 : index
    %0 = vector.load %arg0[%c0, %c0_0] : memref<8x8xf32, #tpu.memory_space<vmem>>, vector<8x8xf32>
    %1 = tpu.iota {dimensions = array<i32: 0>} : vector<8x8xi32>
    %2 = tpu.iota {dimensions = array<i32: 1>} : vector<8x8xi32>
    %3 = arith.cmpi eq, %1, %2 : vector<8x8xi32>
    %4 = arith.extui %3 : vector<8x8xi1> to vector<8x8xi32>
    %5 = arith.sitofp %4 : vector<8x8xi32> to vector<8x8xf32>
    %6 = arith.mulf %0, %5 : vector<8x8xf32>
    %cst = arith.constant dense<0.000000e+00> : vector<8xf32>
    %7 = vector.multi_reduction <add>, %6, %cst [0] : vector<8x8xf32> to vector<8xf32>
    %8 = vector.shape_cast %7 : vector<8xf32> to vector<1x8xf32>
    %9 = arith.mulf %0, %5 : vector<8x8xf32>
    %cst_1 = arith.constant dense<0.000000e+00> : vector<8xf32>
    %10 = vector.multi_reduction <add>, %9, %cst_1 [1] : vector<8x8xf32> to vector<8xf32>
    %11 = vector.shape_cast %10 : vector<8xf32> to vector<8x1xf32>
    %c0_2 = arith.constant 0 : index
    %c0_3 = arith.constant 0 : index
    %12 = vector.load %arg1[%c0_2, %c0_3] : memref<8x1xi32, #tpu.memory_space<vmem>>, vector<8x1xi32>
    %c0_4 = arith.constant 0 : index
    %c0_5 = arith.constant 0 : index
    %13 = vector.load %arg2[%c0_4, %c0_5] : memref<1x8xi32, #tpu.memory_space<vmem>>, vector<1x8xi32>
    %14 = vector.broadcast %12 : vector<8x1xi32> to vector<8x8xi32>
    %15 = vector.broadcast %13 : vector<1x8xi32> to vector<8x8xi32>
    %16 = arith.cmpi ne, %14, %15 : vector<8x8xi32>
    %17 = arith.extui %16 : vector<8x8xi1> to vector<8x8xi32>
    %18 = arith.sitofp %17 : vector<8x8xi32> to vector<8x8xf32>
    %19 = vector.broadcast %8 : vector<1x8xf32> to vector<8x8xf32>
    %20 = arith.subf %0, %19 : vector<8x8xf32>
    %cst_6 = arith.constant 1.000000e-01 : f32
    %21 = vector.broadcast %cst_6 : f32 to vector<8x8xf32>
    %22 = arith.addf %20, %21 : vector<8x8xf32>
    %cst_7 = arith.constant 0.000000e+00 : f32
    %23 = vector.broadcast %cst_7 : f32 to vector<8x8xf32>
    %24 = arith.maximumf %22, %23 : vector<8x8xf32>
    %25 = vector.broadcast %11 : vector<8x1xf32> to vector<8x8xf32>
    %26 = arith.subf %0, %25 : vector<8x8xf32>
    %cst_8 = arith.constant 1.000000e-01 : f32
    %27 = vector.broadcast %cst_8 : f32 to vector<8x8xf32>
    %28 = arith.addf %26, %27 : vector<8x8xf32>
    %cst_9 = arith.constant 0.000000e+00 : f32
    %29 = vector.broadcast %cst_9 : f32 to vector<8x8xf32>
    %30 = arith.maximumf %28, %29 : vector<8x8xf32>
    %31 = arith.addf %24, %30 : vector<8x8xf32>
    %32 = vector.shape_cast %18 : vector<8x8xf32> to vector<1x8x8xf32>
    %cst_10 = arith.constant dense<0.000000e+00> : vector<1xf32>
    %33 = vector.multi_reduction <add>, %32, %cst_10 [1, 2] : vector<1x8x8xf32> to vector<1xf32>
    %34 = vector.shape_cast %33 : vector<1xf32> to vector<1x1x1xf32>
    %35 = vector.extract %34[0, 0, 0] : f32 from vector<1x1x1xf32>
    %cst_11 = arith.constant 9.99999997E-7 : f32
    %36 = arith.addf %cst_11, %35 : f32
    %37 = arith.mulf %31, %18 : vector<8x8xf32>
    %38 = vector.shape_cast %37 : vector<8x8xf32> to vector<1x8x8xf32>
    %cst_12 = arith.constant dense<0.000000e+00> : vector<1xf32>
    %39 = vector.multi_reduction <add>, %38, %cst_12 [1, 2] : vector<1x8x8xf32> to vector<1xf32>
    %40 = vector.shape_cast %39 : vector<1xf32> to vector<1x1x1xf32>
    %41 = vector.extract %40[0, 0, 0] : f32 from vector<1x1x1xf32>
    %42 = arith.divf %41, %36 : f32
    %c0_13 = arith.constant 0 : index
    %c0_14 = arith.constant 0 : index
    %43 = memref.load %arg3[%c0_13, %c0_14] : memref<1x1xf32, #tpu.memory_space<smem>>
    memref.store %42, %arg3[%c0_13, %c0_14] : memref<1x1xf32, #tpu.memory_space<smem>>
    return
  }
}

</mosaic_0001>

<llo_original>
// kernel: coatt_loss.2
$region0: #{coatt_loss.2}
  #allocation0 [shape = 'u32[]', space=smem, size = 0x4, offset = 0x4, fixed_abs, tag = 'smem constant byte address 0x4 - core index']
  #allocation1 [shape = 'u32[144,128]{1,0:T(1,128)}', space=vmem, size = 0x12000, scoped, tag = 'internal scratch']
  %s0 = inlined_call_operand.hbm [shape: f32[8,8,16], index: 0, kind: input, shape index: {}]
  %s1 = inlined_call_operand.vmem [shape: f32[8,8], index: 1, kind: output, shape index: {}]
  %s2 = sld [smem:[#allocation0]]
  $region26: #{coatt_loss.2} parent=0
    _
  %s4 = ssub.s32 1, %s2
  %s5 = scalar_select 0, %s4, %s2
  $region1: #{coatt_loss.2} parent=0
    #allocation2 [shape = 'u8[32768]{0}', space=vmem, size = 0x8000, scoped, tag = 'input window, operand 0, single buffered']
    #allocation3 [shape = 's32[1]{0}', space=sflag, size = 0x4, scoped, tag = 'scoped memory for coatt_loss.2']
    %6 = vsyncpa [#allocation3], 0
    // Predicated region
    $region2: #{coatt_loss.2} parent=1 // pred_check
      _
    $region3: #{coatt_loss.2} parent=1 // pred_check_branch
      %8 = sbr.rel (0) target = $region5
    $region4: #{coatt_loss.2} parent=1 // pred_region
      %s10 = ssub.s32 1024, 1024
      %11 = vsyncadd [#allocation3], %s10
      %s12 = sshll.u32 [#allocation2], 4
      %s13 = int_to_ptr.vmem [resolvable:$true] %s12
      %18 = dma.hbm_to_vmem [thread:$0]  %s0, 1024, %s13, [#allocation3], 128, 128, 8
    $region5: #{coatt_loss.2} parent=1 // pred_fallthru
      _
    // Predicated region
    $region6: #{coatt_loss.2} parent=1 // pred_check
      _
    $region7: #{coatt_loss.2} parent=1 // pred_check_branch
      %20 = sbr.rel (0) target = $region9
    $region8: #{coatt_loss.2} parent=1 // pred_region
      %21 = dma.done [#allocation3], 1024
    $region9: #{coatt_loss.2} parent=1 // pred_fallthru
      _
    %v22 = vld [vmem:[#allocation2] sm:$0xff]
    %v23 = vld [vmem:[#allocation2 + $0x8] sm:$0xff]
    %v24 = vld [vmem:[#allocation2 + $0x10] sm:$0xff]
    %v25 = vld [vmem:[#allocation2 + $0x18] sm:$0xff]
    %v26 = vld [vmem:[#allocation2 + $0x20] sm:$0xff]
    %v27 = vld [vmem:[#allocation2 + $0x28] sm:$0xff]
    %v28 = vld [vmem:[#allocation2 + $0x30] sm:$0xff]
    %v29 = vld [vmem:[#allocation2 + $0x38] sm:$0xff]
    %vm30 = vcmask 130048
    %v31 = vsel %vm30, %v22, -inf
    %32 = vmax.xlane.f32.xlu0 %v31
    %v33 = vpop.xlane.xlu0 %32
    %v34 = vsel %vm30, %v23, -inf
    %35 = vmax.xlane.f32.xlu0 %v34
    %v36 = vpop.xlane.xlu0 %35
    %v37 = vsel %vm30, %v24, -inf
    %38 = vmax.xlane.f32.xlu0 %v37
    %v39 = vpop.xlane.xlu0 %38
    %v40 = vsel %vm30, %v25, -inf
    %41 = vmax.xlane.f32.xlu0 %v40
    %v42 = vpop.xlane.xlu0 %41
    %v43 = vsel %vm30, %v26, -inf
    %44 = vmax.xlane.f32.xlu0 %v43
    %v45 = vpop.xlane.xlu0 %44
    %v46 = vsel %vm30, %v27, -inf
    %47 = vmax.xlane.f32.xlu0 %v46
    %v48 = vpop.xlane.xlu0 %47
    %v49 = vsel %vm30, %v28, -inf
    %50 = vmax.xlane.f32.xlu0 %v49
    %v51 = vpop.xlane.xlu0 %50
    %v52 = vsel %vm30, %v29, -inf
    %53 = vmax.xlane.f32.xlu0 %v52
    %v54 = vpop.xlane.xlu0 %53
    %p55 = scmp.eq.s32.totalorder 0, 0
    // Predicated region
    $region10: #{coatt_loss.2} parent=1 // pred_check
      %p56 = pneg %p55
    $region11: #{coatt_loss.2} parent=1 // pred_check_branch
      %58 = sbr.rel (%p56) target = $region13
    $region12: #{coatt_loss.2} parent=1 // pred_region
      %v67 = vlaneseq
      %v68 = vand.u32 %v67, 127
      %v69 = vlaneseq
      %v70 = vshrl.u32 %v69, 7
      %v71 = vsub.s32 %v68, %v70
      %v72 = vrot.slane %v33, %v71
      %v73 = vlaneseq
      %v74 = vshrl.u32 %v73, 7
      %v75 = vsub.s32 %v68, %v74
      %v76 = vrot.slane %v36, %v75
      %v77 = vlaneseq
      %v78 = vshrl.u32 %v77, 7
      %v79 = vsub.s32 %v68, %v78
      %v80 = vrot.slane %v39, %v79
      %v81 = vlaneseq
      %v82 = vshrl.u32 %v81, 7
      %v83 = vsub.s32 %v68, %v82
      %v84 = vrot.slane %v42, %v83
      %v85 = vlaneseq
      %v86 = vshrl.u32 %v85, 7
      %v87 = vsub.s32 %v68, %v86
      %v88 = vrot.slane %v45, %v87
      %v89 = vlaneseq
      %v90 = vshrl.u32 %v89, 7
      %v91 = vsub.s32 %v68, %v90
      %v92 = vrot.slane %v48, %v91
      %v93 = vlaneseq
      %v94 = vshrl.u32 %v93, 7
      %v95 = vsub.s32 %v68, %v94
      %v96 = vrot.slane %v51, %v95
      %v97 = vlaneseq
      %v98 = vshrl.u32 %v97, 7
      %v99 = vsub.s32 %v68, %v98
      %v100 = vrot.slane %v54, %v99
      %vm101 = vcmask 1041409
      %v102 = vsel %vm101, %v76, %v72
      %vm103 = vcmask 1042434
      %v104 = vsel %vm103, %v80, %v102
      %vm105 = vcmask 1043459
      %v106 = vsel %vm105, %v84, %v104
      %vm107 = vcmask 1044484
      %v108 = vsel %vm107, %v88, %v106
      %vm109 = vcmask 1045509
      %v110 = vsel %vm109, %v92, %v108
      %vm111 = vcmask 1046534
      %v112 = vsel %vm111, %v96, %v110
      %vm113 = vcmask 1047559
      %v114 = vsel %vm113, %v100, %v112
      %vm116 = vcmask 64512
      %117 = vst.msk [vmem:[%s1] sm:$0xff] %vm116, %v114
    $region13: #{coatt_loss.2} parent=1 // pred_fallthru
      _
    %p118 = scmp.gt.s32.totalorder 0, 0
    // Predicated region
    $region14: #{coatt_loss.2} parent=1 // pred_check
      %p119 = pneg %p118
    $region15: #{coatt_loss.2} parent=1 // pred_check_branch
      %121 = sbr.rel (%p119) target = $region17
    $region16: #{coatt_loss.2} parent=1 // pred_region
      %v122 = vld [vmem:[%s1] sm:$0xff]
      %v131 = vlaneseq
      %v132 = vand.u32 %v131, 127
      %v133 = vlaneseq
      %v134 = vshrl.u32 %v133, 7
      %v135 = vsub.s32 %v132, %v134
      %v136 = vrot.slane %v33, %v135
      %v137 = vlaneseq
      %v138 = vshrl.u32 %v137, 7
      %v139 = vsub.s32 %v132, %v138
      %v140 = vrot.slane %v36, %v139
      %v141 = vlaneseq
      %v142 = vshrl.u32 %v141, 7
      %v143 = vsub.s32 %v132, %v142
      %v144 = vrot.slane %v39, %v143
      %v145 = vlaneseq
      %v146 = vshrl.u32 %v145, 7
      %v147 = vsub.s32 %v132, %v146
      %v148 = vrot.slane %v42, %v147
      %v149 = vlaneseq
      %v150 = vshrl.u32 %v149, 7
      %v151 = vsub.s32 %v132, %v150
      %v152 = vrot.slane %v45, %v151
      %v153 = vlaneseq
      %v154 = vshrl.u32 %v153, 7
      %v155 = vsub.s32 %v132, %v154
      %v156 = vrot.slane %v48, %v155
      %v157 = vlaneseq
      %v158 = vshrl.u32 %v157, 7
      %v159 = vsub.s32 %v132, %v158
      %v160 = vrot.slane %v51, %v159
      %v161 = vlaneseq
      %v162 = vshrl.u32 %v161, 7
      %v163 = vsub.s32 %v132, %v162
      %v164 = vrot.slane %v54, %v163
      %vm165 = vcmask 1041409
      %v166 = vsel %vm165, %v140, %v136
      %vm167 = vcmask 1042434
      %v168 = vsel %vm167, %v144, %v166
      %vm169 = vcmask 1043459
      %v170 = vsel %vm169, %v148, %v168
      %vm171 = vcmask 1044484
      %v172 = vsel %vm171, %v152, %v170
      %vm173 = vcmask 1045509
      %v174 = vsel %vm173, %v156, %v172
      %vm175 = vcmask 1046534
      %v176 = vsel %vm175, %v160, %v174
      %vm177 = vcmask 1047559
      %v178 = vsel %vm177, %v164, %v176
      %v180 = vmax.f32 %v122, %v178
      %vm181 = vcmask 64512
      %182 = vst.msk [vmem:[%s1] sm:$0xff] %vm181, %v180
    $region17: #{coatt_loss.2} parent=1 // pred_fallthru
      _
    // Predicated region
    $region18: #{coatt_loss.2} parent=1 // pred_check
      _
    $region19: #{coatt_loss.2} parent=1 // pred_check_branch
      %184 = sbr.rel (0) target = $region21
    $region20: #{coatt_loss.2} parent=1 // pred_region
      _
    $region21: #{coatt_loss.2} parent=1 // pred_fallthru
      _
    // Predicated region
    $region22: #{coatt_loss.2} parent=1 // pred_check
      _
    $region23: #{coatt_loss.2} parent=1 // pred_check_branch
      %186 = sbr.rel (0) target = $region25
    $region24: #{coatt_loss.2} parent=1 // pred_region
      _
    $region25: #{coatt_loss.2} parent=1 // pred_fallthru
      _
    %187 = vsyncpa [#allocation3], 1

// kernel: coatt_loss.3
$region0: #{coatt_loss.3}
  #allocation0 [shape = 'u32[]', space=smem, size = 0x4, offset = 0x4, fixed_abs, tag = 'smem constant byte address 0x4 - core index']
  #allocation1 [shape = 'u32[144,128]{1,0:T(1,128)}', space=vmem, size = 0x12000, scoped, tag = 'internal scratch']
  %s0 = inlined_call_operand.vmem [shape: f32[8,8], index: 0, kind: input, shape index: {}]
  %s1 = inlined_call_operand.vmem [shape: s32[8,1], index: 1, kind: input, shape index: {}]
  %s2 = inlined_call_operand.vmem [shape: s32[1,8], index: 2, kind: input, shape index: {}]
  %s3 = inlined_call_operand.hbm [shape: f32[1,1], index: 3, kind: output, shape index: {}]
  %s4 = sld [smem:[#allocation0]]
  $region22: #{coatt_loss.3} parent=0
    _
  %s6 = ssub.s32 1, %s4
  %s7 = scalar_select 0, %s6, %s4
  $region1: #{coatt_loss.3} parent=0
    #allocation2 [shape = 'u8[512]{0}', space=smem, size = 0x200, scoped, tag = 'output window, operand 0, single buffered']
    #allocation3 [shape = 's32[1]{0}', space=sflag, size = 0x4, scoped, tag = 'scoped memory for coatt_loss.3']
    %8 = vsyncpa [#allocation3], 0
    // Predicated region
    $region2: #{coatt_loss.3} parent=1 // pred_check
      _
    $region3: #{coatt_loss.3} parent=1 // pred_check_branch
      %10 = sbr.rel (0) target = $region5
    $region4: #{coatt_loss.3} parent=1 // pred_region
      _
    $region5: #{coatt_loss.3} parent=1 // pred_fallthru
      _
    // Predicated region
    $region6: #{coatt_loss.3} parent=1 // pred_check
      _
    $region7: #{coatt_loss.3} parent=1 // pred_check_branch
      %12 = sbr.rel (0) target = $region9
    $region8: #{coatt_loss.3} parent=1 // pred_region
      _
    $region9: #{coatt_loss.3} parent=1 // pred_fallthru
      _
    // Predicated region
    $region10: #{coatt_loss.3} parent=1 // pred_check
      _
    $region11: #{coatt_loss.3} parent=1 // pred_check_branch
      %14 = sbr.rel (0) target = $region13
    $region12: #{coatt_loss.3} parent=1 // pred_region
      _
    $region13: #{coatt_loss.3} parent=1 // pred_fallthru
      _
    %v15 = vld [vmem:[%s0] sm:$0xff]
    %v16 = vlaneseq
    %v17 = vshrl.u32 %v16, 7
    %v18 = vlaneseq
    %v19 = vand.u32 %v18, 127
    %vm20 = vcmp.eq.s32.totalorder %v17, %v19
    %v21 = vsel %vm20, 1, 0
    %v22 = vcvt.s32.f32 %v21
    %v23 = vmul.f32 %v15, %v22
    %vm24 = vcmask 64512
    %v25 = vsel %vm24, %v23, 0.0
    %v26 = vrot.slane %v25, 4
    %v27 = vadd.f32 %v25, %v26
    %v28 = vrot.slane %v27, 2
    %v29 = vadd.f32 %v27, %v28
    %v30 = vrot.slane %v29, 1
    %v31 = vadd.f32 %v29, %v30
    %32 = vadd.xlane.f32.xlu0 %v25
    %v33 = vpop.xlane.xlu0 %32
    %v34 = vld [vmem:[%s1] sm:$0xff]
    %v35 = vld [vmem:[%s2] sm:$0x1]
    %36 = vset.pattern.permute.xlu0 0
    %37 = vperm.xlu0 %36, %v34
    %v38 = vpop.permute.xlu0 %37
    %v39 = vlaneseq
    %v40 = vshrl.u32 %v39, 7
    %v41 = vsub.s32 0, %v40
    %v42 = vrot.slane %v35, %v41
    %vm43 = vcmp.ne.s32.totalorder %v38, %v42
    %v44 = vsel %vm43, 1, 0
    %v45 = vcvt.s32.f32 %v44
    %v46 = vsub.f32 %v15, %v31
    %v47 = vadd.f32 %v46, 0.1
    %v48 = vmax.f32 %v47, 0.0
    %v49 = vsub.f32 %v15, %v33
    %v50 = vadd.f32 %v49, 0.1
    %v51 = vmax.f32 %v50, 0.0
    %v52 = vadd.f32 %v48, %v51
    %v53 = vsel %vm24, %v45, 0.0
    %54 = vadd.xlane.f32.xlu0 %v53
    %v55 = vpop.xlane.xlu0 %54
    %v56 = vrot.slane %v55, 4
    %v57 = vadd.f32 %v55, %v56
    %v58 = vrot.slane %v57, 2
    %v59 = vadd.f32 %v57, %v58
    %v60 = vrot.slane %v59, 1
    %v61 = vadd.f32 %v59, %v60
    %s62 = vtos %v61
    %s63 = sadd.f32 %s62, 1e-06
    %v64 = vmul.f32 %v52, %v45
    %v65 = vsel %vm24, %v64, 0.0
    %66 = vadd.xlane.f32.xlu0 %v65
    %v67 = vpop.xlane.xlu0 %66
    %v68 = vrot.slane %v67, 4
    %v69 = vadd.f32 %v67, %v68
    %v70 = vrot.slane %v69, 2
    %v71 = vadd.f32 %v69, %v70
    %v72 = vrot.slane %v71, 1
    %v73 = vadd.f32 %v71, %v72
    %s74 = vtos %v73
    %v75 = vstv %s63
    %v76 = vrcp.pop %v75
    %s77 = vtos %v76
    %s78 = smul.f32 %s74, %s77
    %s79 = scalar_lea.smem [#allocation2], 0
    %80 = sst [smem:[%s79]] %s78
    // Predicated region
    $region14: #{coatt_loss.3} parent=1 // pred_check
      _
    $region15: #{coatt_loss.3} parent=1 // pred_check_branch
      %82 = sbr.rel (0) target = $region17
    $region16: #{coatt_loss.3} parent=1 // pred_region
      %s84 = ssub.s32 16, 16
      %85 = vsyncadd [#allocation3], %s84
      %88 = dma.smem_to_hbm [#allocation2], 16, %s3, [#allocation3]
    $region17: #{coatt_loss.3} parent=1 // pred_fallthru
      _
    // Predicated region
    $region18: #{coatt_loss.3} parent=1 // pred_check
      _
    $region19: #{coatt_loss.3} parent=1 // pred_check_branch
      %90 = sbr.rel (0) target = $region21
    $region20: #{coatt_loss.3} parent=1 // pred_region
      %91 = dma.done [#allocation3], 16
    $region21: #{coatt_loss.3} parent=1 // pred_fallthru
      _
    %92 = sfence
    %93 = vsyncpa [#allocation3], 1

</llo_original>
